<compile_context>
chip_gen: v7x
topology: tpu7x:2x2x1
jax: 0.10.0
libtpu: 0.0.40
codegen_flags: <defaults>
</compile_context>

<pallas_src>
import functools

import jax
import jax.numpy as jnp
from jax.experimental import pallas as pl
from jax.experimental.pallas import tpu as pltpu

_BN_EPS = 1e-5
_BN_TR = 256                       # BatchNorm row-tile (tiled path)
_BN_SINGLE_MAX = 1 << 19           # <= 512K elems -> single-pass whole-slab BN
_VMEM_LIMIT = 32 * 1024 * 1024     # safe on v5e / v6e / v7x


def _round_up(x, m):
    return (x + m - 1) // m * m


# --------------------------------------------------------------------------
# Pallas kernels
# --------------------------------------------------------------------------
def _matmul_kernel(a_ref, b_ref, o_ref, acc_ref):
    @pl.when(pl.program_id(2) == 0)
    def _init():
        acc_ref[...] = jnp.zeros_like(acc_ref)

    acc_ref[...] += jnp.dot(a_ref[...], b_ref[...],
                            preferred_element_type=jnp.float32)

    @pl.when(pl.program_id(2) == pl.num_programs(2) - 1)
    def _store():
        o_ref[...] = acc_ref[...].astype(o_ref.dtype)


def _matmul_bias_kernel(a_ref, b_ref, bias_ref, o_ref, acc_ref):
    @pl.when(pl.program_id(2) == 0)
    def _init():
        acc_ref[...] = jnp.zeros_like(acc_ref)

    acc_ref[...] += jnp.dot(a_ref[...], b_ref[...],
                            preferred_element_type=jnp.float32)

    @pl.when(pl.program_id(2) == pl.num_programs(2) - 1)
    def _store():
        o_ref[...] = (acc_ref[...] + bias_ref[...]).astype(o_ref.dtype)


def _make_bn_single_kernel(relu: bool, with_res: bool):
    # single-pass training-mode BN: stats + normalize (+residual)(+ReLU) on a
    # whole (R, C) slab resident in VMEM.  f32 math, bf16 in/out.
    def _core(x_ref, g_ref, b_ref, res):
        x = x_ref[...].astype(jnp.float32)
        mean = jnp.mean(x, axis=0, keepdims=True)
        var = jnp.maximum(jnp.mean(x * x, axis=0, keepdims=True) - mean * mean, 0.0)
        scale = g_ref[...] * jax.lax.rsqrt(var + _BN_EPS)
        shift = b_ref[...] - mean * scale
        y = x * scale + shift
        if res is not None:
            y = y + res
        if relu:
            y = jnp.maximum(y, 0.0)
        return y

    if with_res:
        def kernel(x_ref, g_ref, b_ref, r_ref, o_ref):
            y = _core(x_ref, g_ref, b_ref, r_ref[...].astype(jnp.float32))
            o_ref[...] = y.astype(o_ref.dtype)
    else:
        def kernel(x_ref, g_ref, b_ref, o_ref):
            y = _core(x_ref, g_ref, b_ref, None)
            o_ref[...] = y.astype(o_ref.dtype)
    return kernel


_BN_SINGLE_KERNELS = {(r, w): _make_bn_single_kernel(r, w)
                      for r in (False, True) for w in (False, True)}


def _bn_stats_kernel(x_ref, sum_ref, sq_ref):
    # tiled pass 1: per-channel sum / sum-of-squares over row tiles (f32 acc)
    @pl.when(pl.program_id(0) == 0)
    def _init():
        sum_ref[...] = jnp.zeros_like(sum_ref)
        sq_ref[...] = jnp.zeros_like(sq_ref)

    x = x_ref[...].astype(jnp.float32)
    sum_ref[...] += jnp.sum(x, axis=0, keepdims=True)
    sq_ref[...] += jnp.sum(x * x, axis=0, keepdims=True)


def _make_bn_apply_kernel(relu: bool, with_res: bool):
    # tiled pass 2: y = x*scale + shift (+ residual) (+ ReLU), tiled over rows
    if with_res:
        def kernel(x_ref, scale_ref, shift_ref, r_ref, o_ref):
            y = x_ref[...].astype(jnp.float32) * scale_ref[...] + shift_ref[...]
            y = y + r_ref[...].astype(jnp.float32)
            if relu:
                y = jnp.maximum(y, 0.0)
            o_ref[...] = y.astype(o_ref.dtype)
    else:
        def kernel(x_ref, scale_ref, shift_ref, o_ref):
            y = x_ref[...].astype(jnp.float32) * scale_ref[...] + shift_ref[...]
            if relu:
                y = jnp.maximum(y, 0.0)
            o_ref[...] = y.astype(o_ref.dtype)
    return kernel


_BN_APPLY_KERNELS = {(r, w): _make_bn_apply_kernel(r, w)
                     for r in (False, True) for w in (False, True)}


def _mean_axis1_kernel(x_ref, o_ref):
    # average pool: block (TB, K, C) -> (TB, C), mean over axis 1
    o_ref[...] = jnp.mean(x_ref[...].astype(jnp.float32), axis=1)


def _att_combine_kernel(fa_ref, fg_ref, logit_ref, o_ref):
    # softmax over the appearance/gait axis (dim=2 of the (B,1,2,1) torch att),
    # then f = w_app * f_a + w_gait * f_g
    l = logit_ref[...]                                   # (B, 2)
    m = jnp.max(l, axis=1, keepdims=True)
    e = jnp.exp(l - m)
    w = e / jnp.sum(e, axis=1, keepdims=True)
    o_ref[...] = fa_ref[...] * w[:, 0:1] + fg_ref[...] * w[:, 1:2]


# --------------------------------------------------------------------------
# Pallas wrappers
# --------------------------------------------------------------------------
@functools.partial(jax.jit, static_argnames=("n_out", "out_dtype"))
def _matmul_impl(a, b, bias, *, n_out, out_dtype):
    """a: (M, K) any float; b: (Kp, Np) bf16 pre-padded to 128-multiples."""
    a = a.astype(jnp.bfloat16)
    M, K = a.shape
    Kp, Np = b.shape
    Mp = _round_up(M, 128)
    if (Mp, Kp) != (M, K):
        a = jnp.pad(a, ((0, Mp - M), (0, Kp - K)))

    tm = 256 if Mp % 256 == 0 else 128
    tn = 256 if Np % 256 == 0 else 128
    tk = 512 if Kp % 512 == 0 else (256 if Kp % 256 == 0 else 128)
    grid = (Mp // tm, Np // tn, Kp // tk)

    if bias is not None:
        kernel = _matmul_bias_kernel
        in_specs = [pl.BlockSpec((tm, tk), lambda i, j, k: (i, k)),
                    pl.BlockSpec((tk, tn), lambda i, j, k: (k, j)),
                    pl.BlockSpec((1, tn), lambda i, j, k: (0, j))]
        args = (a, b, bias)
    else:
        kernel = _matmul_kernel
        in_specs = [pl.BlockSpec((tm, tk), lambda i, j, k: (i, k)),
                    pl.BlockSpec((tk, tn), lambda i, j, k: (k, j))]
        args = (a, b)

    out = pl.pallas_call(
        kernel,
        out_shape=jax.ShapeDtypeStruct((Mp, Np), out_dtype),
        grid_spec=pltpu.PrefetchScalarGridSpec(
            num_scalar_prefetch=0,
            grid=grid,
            in_specs=in_specs,
            out_specs=pl.BlockSpec((tm, tn), lambda i, j, k: (i, j)),
            scratch_shapes=[pltpu.VMEM((tm, tn), jnp.float32)]),
        compiler_params=pltpu.CompilerParams(
            dimension_semantics=("parallel", "parallel", "arbitrary"),
            vmem_limit_bytes=_VMEM_LIMIT),
    )(*args)
    return out[:M, :n_out]


def matmul(a, b, bias=None, n_out=None, out_dtype=jnp.bfloat16):
    if n_out is None:
        n_out = b.shape[1]
    return _matmul_impl(a, b, bias, n_out=n_out, out_dtype=out_dtype)


@functools.partial(jax.jit, static_argnames=("relu",))
def _bn_single(x2, gamma, beta, residual, relu):
    """Single-pass training-mode BN on a whole (R, C) slab (small slabs only)."""
    R, C = x2.shape
    x2 = x2.astype(jnp.bfloat16)
    with_res = residual is not None
    kern = _BN_SINGLE_KERNELS[(relu, with_res)]
    args = [x2, gamma, beta]
    if with_res:
        args.append(residual.astype(jnp.bfloat16))
    return pl.pallas_call(
        kern,
        out_shape=jax.ShapeDtypeStruct((R, C), jnp.bfloat16),
        compiler_params=pltpu.CompilerParams(vmem_limit_bytes=_VMEM_LIMIT),
    )(*args)


@functools.partial(jax.jit, static_argnames=("relu",))
def _bn_tiled(x2, gamma, beta, residual, relu):
    """Training-mode BN over rows (batch*spatial), channels on lanes.
    Two-pass tiled: pass 1 accumulates per-channel sum/sumsq (stats divided by
    the TRUE row count so zero-row padding never corrupts them); pass 2 applies
    scale/shift(+residual)(+ReLU) over row tiles.  VMEM-safe for big slabs."""
    R, C = x2.shape
    x2 = x2.astype(jnp.bfloat16)
    Rp = _round_up(R, _BN_TR)
    xp = jnp.pad(x2, ((0, Rp - R), (0, 0))) if Rp != R else x2
    nblk = Rp // _BN_TR

    ssum, ssq = pl.pallas_call(
        _bn_stats_kernel,
        out_shape=(jax.ShapeDtypeStruct((1, C), jnp.float32),
                   jax.ShapeDtypeStruct((1, C), jnp.float32)),
        grid_spec=pltpu.PrefetchScalarGridSpec(
            num_scalar_prefetch=0,
            grid=(nblk,),
            in_specs=[pl.BlockSpec((_BN_TR, C), lambda i: (i, 0))],
            out_specs=(pl.BlockSpec((1, C), lambda i: (0, 0)),
                       pl.BlockSpec((1, C), lambda i: (0, 0)))),
        compiler_params=pltpu.CompilerParams(
            dimension_semantics=("arbitrary",),
            vmem_limit_bytes=_VMEM_LIMIT),
    )(xp)

    mean = ssum / R
    var = jnp.maximum(ssq / R - mean * mean, 0.0)     # biased variance (torch training)
    scale = gamma * jax.lax.rsqrt(var + _BN_EPS)      # (1, C)
    shift = beta - mean * scale                       # (1, C)

    with_res = residual is not None
    kern = _BN_APPLY_KERNELS[(relu, with_res)]
    args = [xp, scale, shift]
    in_specs = [pl.BlockSpec((_BN_TR, C), lambda i: (i, 0)),
                pl.BlockSpec((1, C), lambda i: (0, 0)),
                pl.BlockSpec((1, C), lambda i: (0, 0))]
    if with_res:
        r2 = residual.astype(jnp.bfloat16)
        rp = jnp.pad(r2, ((0, Rp - R), (0, 0))) if Rp != R else r2
        args.append(rp)
        in_specs.append(pl.BlockSpec((_BN_TR, C), lambda i: (i, 0)))

    out = pl.pallas_call(
        kern,
        out_shape=jax.ShapeDtypeStruct((Rp, C), jnp.bfloat16),
        grid_spec=pltpu.PrefetchScalarGridSpec(
            num_scalar_prefetch=0,
            grid=(nblk,),
            in_specs=in_specs,
            out_specs=pl.BlockSpec((_BN_TR, C), lambda i: (i, 0))),
        compiler_params=pltpu.CompilerParams(
            dimension_semantics=("parallel",),
            vmem_limit_bytes=_VMEM_LIMIT),
    )(*args)
    return out[:R]


def batchnorm(x, bn, relu=False, residual=None):
    shape = x.shape
    c = shape[-1]
    x2 = x.reshape(-1, c)
    r2 = None if residual is None else residual.reshape(-1, c)
    if x2.shape[0] * c <= _BN_SINGLE_MAX:
        out = _bn_single(x2, bn["gamma"], bn["beta"], r2, relu=relu)
    else:
        out = _bn_tiled(x2, bn["gamma"], bn["beta"], r2, relu=relu)
    return out.reshape(shape)


@jax.jit
def mean_axis1(x):
    # (M, K, C) -> (M, C), mean over axis 1; tiled over rows.
    m, k, c = x.shape
    tb = 8
    mp = _round_up(m, tb)
    if mp != m:
        x = jnp.pad(x, ((0, mp - m), (0, 0), (0, 0)))
    out = pl.pallas_call(
        _mean_axis1_kernel,
        out_shape=jax.ShapeDtypeStruct((mp, c), jnp.float32),
        grid_spec=pltpu.PrefetchScalarGridSpec(
            num_scalar_prefetch=0,
            grid=(mp // tb,),
            in_specs=[pl.BlockSpec((tb, k, c), lambda i: (i, 0, 0))],
            out_specs=pl.BlockSpec((tb, c), lambda i: (i, 0))),
        compiler_params=pltpu.CompilerParams(
            dimension_semantics=("parallel",),
            vmem_limit_bytes=_VMEM_LIMIT),
    )(x)
    return out[:m]


@jax.jit
def att_combine(f_a, f_g, logits):
    return pl.pallas_call(
        _att_combine_kernel,
        out_shape=jax.ShapeDtypeStruct(f_a.shape, jnp.float32),
    )(f_a, f_g, logits)


# --------------------------------------------------------------------------
# Conv / pooling glue (im2col + Pallas matmul)
# --------------------------------------------------------------------------
def conv2d(x, conv, stride=1, padding=0, bias=None):
    # x: (N, H, W, Cin) NHWC ; conv["w"]: (kh*kw*cin padded, cout padded) bf16
    kh, kw, cin, cout = conv["kh"], conv["kw"], conv["cin"], conv["cout"]
    n = x.shape[0]
    x = x.astype(jnp.bfloat16)
    if padding:
        x = jnp.pad(x, ((0, 0), (padding, padding), (padding, padding), (0, 0)))
    hp, wp = x.shape[1], x.shape[2]
    ho = (hp - kh) // stride + 1
    wo = (wp - kw) // stride + 1
    if kh == 1 and kw == 1:
        a = x[:, ::stride, ::stride, :].reshape(n * ho * wo, cin)
    else:
        # TODO(synk): im2col still materializes kh*kw shifted bf16 copies in HBM;
        # a direct tap-accumulating conv kernel (manual DMA windows) would remove
        # that traffic but needs on-chip iteration to validate lowering.
        patches = []
        for di in range(kh):
            for dj in range(kw):
                patches.append(
                    x[:, di:di + (ho - 1) * stride + 1:stride,
                         dj:dj + (wo - 1) * stride + 1:stride, :])
        a = jnp.stack(patches, axis=3).reshape(n * ho * wo, kh * kw * cin)
    y = matmul(a, conv["w"], bias=bias, n_out=cout, out_dtype=jnp.bfloat16)
    return y.reshape(n, ho, wo, cout)


def dense(x, p, out_dtype=jnp.bfloat16):
    return matmul(x, p["w"], bias=p["bias"], n_out=p["cout"], out_dtype=out_dtype)


def maxpool_3x3_s2_p1(x):
    # TODO(synk): 3x3 max-pool left as jax.lax.reduce_window glue (tiny reduction).
    return jax.lax.reduce_window(
        x, jnp.array(-jnp.inf, x.dtype), jax.lax.max,
        (1, 3, 3, 1), (1, 2, 2, 1),
        ((0, 0), (1, 1), (1, 1), (0, 0)))


# --------------------------------------------------------------------------
# Deterministic parameter init (shapes follow torchvision resnet50 + the module)
# --------------------------------------------------------------------------
class KeyGen:
    def __init__(self, seed=0):
        self._key = jax.random.PRNGKey(seed)

    def __call__(self):
        self._key, sub = jax.random.split(self._key)
        return sub


def _pad2d(x):
    r = _round_up(x.shape[0], 128)
    c = _round_up(x.shape[1], 128)
    if (r, c) != x.shape:
        x = jnp.pad(x, ((0, r - x.shape[0]), (0, c - x.shape[1])))
    return x


def init_bn(c):
    return {"gamma": jnp.ones((1, c), jnp.float32),
            "beta": jnp.zeros((1, c), jnp.float32)}


def init_conv(kg, cin, cout, k):
    fan_in = cin * k * k
    w = jax.random.normal(kg(), (k, k, cin, cout), jnp.float32) * (2.0 / fan_in) ** 0.5
    w2 = _pad2d(w.reshape(k * k * cin, cout)).astype(jnp.bfloat16)   # pre-pad + bf16 once
    return {"w": w2, "kh": k, "kw": k, "cin": cin, "cout": cout}


def init_dense(kg, cin, cout, bias=False):
    w = jax.random.normal(kg(), (cin, cout), jnp.float32) * (2.0 / cin) ** 0.5
    p = {"w": _pad2d(w).astype(jnp.bfloat16), "cout": cout, "bias": None}
    if bias:
        p["bias"] = jnp.zeros((1, _round_up(cout, 128)), jnp.float32)
    return p


def init_bottleneck(kg, inplanes, planes, stride, downsample):
    p = {"conv1": init_conv(kg, inplanes, planes, 1), "bn1": init_bn(planes),
         "conv2": init_conv(kg, planes, planes, 3), "bn2": init_bn(planes),
         "conv3": init_conv(kg, planes, planes * 4, 1), "bn3": init_bn(planes * 4),
         "stride": stride}
    if downsample:
        p["ds_conv"] = init_conv(kg, inplanes, planes * 4, 1)
        p["ds_bn"] = init_bn(planes * 4)
    return p


def init_resnet50(kg, last_stride=1):
    params = {"conv1": init_conv(kg, 3, 64, 7), "bn1": init_bn(64), "layers": []}
    cfg = [(64, 3, 1), (128, 4, 2), (256, 6, 2), (512, 3, last_stride)]
    inplanes = 64
    for planes, n_blocks, stride in cfg:
        blocks = []
        for i in range(n_blocks):
            s = stride if i == 0 else 1
            blocks.append(init_bottleneck(kg, inplanes, planes, s, downsample=(i == 0)))
            inplanes = planes * 4
        params["layers"].append(blocks)
    return params


def init_model(kg, num_classes):
    return {
        # layer4[0].conv2.stride and downsample stride forced to 1 (as in module)
        "base_appearance": init_resnet50(kg, last_stride=1),
        "base_gait": init_resnet50(kg, last_stride=1),
        "attconv": [
            dict(init_dense(kg, 2048, 512, bias=True), bn=init_bn(512)),
            dict(init_dense(kg, 512, 64, bias=True), bn=init_bn(64)),
            dict(init_dense(kg, 64, 1, bias=True), bn=init_bn(1)),
        ],
        "groupingbn": init_bn(2048),
        "nonlinear": {  # Bottleneck1x1(2048, 512), all 1x1, no downsample
            "conv1": init_dense(kg, 2048, 512), "bn1": init_bn(512),
            "conv2": init_dense(kg, 512, 512), "bn2": init_bn(512),
            "conv3": init_dense(kg, 512, 2048), "bn3": init_bn(2048),
        },
        "bn1d": init_bn(2048),
        "fc": init_dense(kg, 2048, num_classes, bias=True),
    }


# --------------------------------------------------------------------------
# Forward pass
# --------------------------------------------------------------------------
def bottleneck_forward(x, p):
    s = p["stride"]
    out = conv2d(x, p["conv1"], stride=1, padding=0)
    out = batchnorm(out, p["bn1"], relu=True)
    out = conv2d(out, p["conv2"], stride=s, padding=1)
    out = batchnorm(out, p["bn2"], relu=True)
    out = conv2d(out, p["conv3"], stride=1, padding=0)
    if "ds_conv" in p:
        residual = conv2d(x, p["ds_conv"], stride=s, padding=0)
        residual = batchnorm(residual, p["ds_bn"], relu=False)
    else:
        residual = x
    return batchnorm(out, p["bn3"], relu=True, residual=residual)


def resnet50_forward(x, params):
    x = conv2d(x, params["conv1"], stride=2, padding=3)
    x = batchnorm(x, params["bn1"], relu=True)
    x = maxpool_3x3_s2_p1(x)
    for blocks in params["layers"]:
        for p in blocks:
            x = bottleneck_forward(x, p)
    return x


def branch_features(x_5d, backbone_params, training):
    # x_5d: (B, C, T, H, W) -> permute(0,2,1,3,4) + reshape(B*T, C, H, W) -> NHWC
    B, C, T, H, W = x_5d.shape
    frames = jnp.transpose(x_5d, (0, 2, 3, 4, 1)).reshape(B * T, H, W, C)
    frames = frames.astype(jnp.bfloat16)
    feat = resnet50_forward(frames, backbone_params)         # (B*T, h, w, 2048) bf16
    bt, fh, fw, fc = feat.shape
    if training:
        # avg_pool2d over (h,w) followed by avg_pool1d over T == one mean over
        # T*h*w (all frames share the spatial extent) -> single fused pool.
        pooled = mean_axis1(feat.reshape(B, T * fh * fw, fc))   # (B, 2048) f32
        return None, pooled
    per_frame = mean_axis1(feat.reshape(bt, fh * fw, fc))        # (B*T, 2048) f32
    return per_frame.reshape(B, T, fc), None


def nonlinear_forward(f, p):
    out = dense(f, p["conv1"])
    out = batchnorm(out, p["bn1"], relu=True)
    out = dense(out, p["conv2"])
    out = batchnorm(out, p["bn2"], relu=True)
    out = dense(out, p["conv3"])
    return batchnorm(out, p["bn3"], relu=True, residual=f)


def model_forward(x, x_g, params, training=True):
    feat_a, f_a = branch_features(x, params["base_appearance"], training)
    feat_g, f_g = branch_features(x_g, params["base_gait"], training)
    if not training:
        # eval mode returns per-frame features shaped (B, 2048, T), like the module
        return jnp.transpose(feat_a, (0, 2, 1)), jnp.transpose(feat_g, (0, 2, 1))

    B = f_a.shape[0]
    # f_cat == torch (B, 2048, 2, 1); as rows: [b0_app, b0_gait, b1_app, b1_gait, ...]
    fcat = jnp.stack([f_a, f_g], axis=1).reshape(2 * B, 2048)
    a = fcat
    for layer in params["attconv"]:
        a = dense(a, layer)                                  # 1x1 conv (+fused bias)
        a = batchnorm(a, layer["bn"], relu=True)             # BN2d + ReLU (training stats)
    logits = a.reshape(B, 2).astype(jnp.float32)             # att before softmax (torch dim=2)

    f = att_combine(f_a, f_g, logits)                        # softmax, weight, sum -> (B, 2048)
    f = batchnorm(f, params["groupingbn"], relu=False)       # groupingbn (no activation)
    f = nonlinear_forward(f, params["nonlinear"])            # Bottleneck1x1, identity residual
    f = batchnorm(f, params["bn1d"], relu=False)             # BatchNorm1d
    y = dense(f, params["fc"], out_dtype=jnp.float32)        # classifier (fused bias)
    return y                                                 # loss == {'xent'}


# --------------------------------------------------------------------------
if __name__ == "__main__":
    B, T, H, W = 2, 2, 32, 32
    NUM_CLASSES = 10

    kg = KeyGen(0)
    params = init_model(kg, NUM_CLASSES)

    kx, kg_in = jax.random.split(jax.random.PRNGKey(0))
    x = jax.random.normal(kx, (B, 3, T, H, W), jnp.float32)       # appearance clip
    x_g = jax.random.normal(kg_in, (B, 3, T, H, W), jnp.float32)  # gait clip

    y = model_forward(x, x_g, params, training=True)
    y = jax.block_until_ready(y)

    assert y.shape == (B, NUM_CLASSES), y.shape
    assert bool(jnp.all(jnp.isfinite(y)))
    print("KERNEL_OK")
</pallas_src>

<mosaic_0001>
module attributes {stable_mosaic.version = 11 : i64} {
  func.func @_matmul_kernel(%arg0: i32, %arg1: i32, %arg2: i32, %arg3: memref<256x256xbf16, #tpu.memory_space<vmem>>, %arg4: memref<256x128xbf16, #tpu.memory_space<vmem>>, %arg5: memref<256x128xbf16, #tpu.memory_space<vmem>>, %arg6: memref<256x128xf32, #tpu.memory_space<vmem>>) attributes {dimension_semantics = [#tpu.dimension_semantics<parallel>, #tpu.dimension_semantics<parallel>, #tpu.dimension_semantics<arbitrary>], iteration_bounds = array<i64: 4, 1, 1>, scalar_prefetch = 0 : i64, scratch_operands = 1 : i64, tpu.core_type = #tpu.core_type<tc>, window_params = [{transform_indices = @transform_0, window_bounds = array<i64: 256, 256>}, {transform_indices = @transform_1, window_bounds = array<i64: 256, 128>}, {transform_indices = @transform_2, window_bounds = array<i64: 256, 128>}]} {
    %c0_i32 = arith.constant 0 : i32
    %0 = arith.cmpi eq, %arg2, %c0_i32 : i32
    %1 = arith.extui %0 : i1 to i32
    %c0_i32_0 = arith.constant 0 : i32
    %2 = arith.cmpi ne, %1, %c0_i32_0 : i32
    scf.if %2 {
      %cst_10 = arith.constant 0.000000e+00 : f32
      %12 = vector.broadcast %cst_10 : f32 to vector<256x128xf32>
      %c0_11 = arith.constant 0 : index
      %c0_12 = arith.constant 0 : index
      %13 = vector.load %arg6[%c0_11, %c0_12] : memref<256x128xf32, #tpu.memory_space<vmem>>, vector<256x128xf32>
      tpu.vector_store %arg6[%c0_11, %c0_12], %12 {strides = array<i32>} : memref<256x128xf32, #tpu.memory_space<vmem>>, vector<256x128xf32>,
    } else {
    }
    %c0 = arith.constant 0 : index
    %c0_1 = arith.constant 0 : index
    %3 = vector.load %arg6[%c0, %c0_1] : memref<256x128xf32, #tpu.memory_space<vmem>>, vector<256x128xf32>
    %c0_2 = arith.constant 0 : index
    %c0_3 = arith.constant 0 : index
    %4 = vector.load %arg3[%c0_2, %c0_3] : memref<256x256xbf16, #tpu.memory_space<vmem>>, vector<256x256xbf16>
    %c0_4 = arith.constant 0 : index
    %c0_5 = arith.constant 0 : index
    %5 = vector.load %arg4[%c0_4, %c0_5] : memref<256x128xbf16, #tpu.memory_space<vmem>>, vector<256x128xbf16>
    %cst = arith.constant dense<0.000000e+00> : vector<256x128xf32>
    %6 = tpu.matmul %4, %5, %cst {dimension_numbers = #tpu.dot_dimension_numbers<[1], [0], [0], [1], [0, 0, 1, 1], [], []>} : vector<256x256xbf16>, vector<256x128xbf16>, vector<256x128xf32> -> vector<256x128xf32>
    %7 = arith.addf %3, %6 : vector<256x128xf32>
    %c0_6 = arith.constant 0 : index
    %c0_7 = arith.constant 0 : index
    %8 = vector.load %arg6[%c0_6, %c0_7] : memref<256x128xf32, #tpu.memory_space<vmem>>, vector<256x128xf32>
    tpu.vector_store %arg6[%c0_6, %c0_7], %7 {strides = array<i32>} : memref<256x128xf32, #tpu.memory_space<vmem>>, vector<256x128xf32>,
    %c0_i32_8 = arith.constant 0 : i32
    %9 = arith.cmpi eq, %arg2, %c0_i32_8 : i32
    %10 = arith.extui %9 : i1 to i32
    %c0_i32_9 = arith.constant 0 : i32
    %11 = arith.cmpi ne, %10, %c0_i32_9 : i32
    scf.if %11 {
      %c0_10 = arith.constant 0 : index
      %c0_11 = arith.constant 0 : index
      %12 = vector.load %arg6[%c0_10, %c0_11] : memref<256x128xf32, #tpu.memory_space<vmem>>, vector<256x128xf32>
      %13 = arith.truncf %12 : vector<256x128xf32> to vector<256x128xbf16>
      %c0_12 = arith.constant 0 : index
      %c0_13 = arith.constant 0 : index
      %14 = vector.load %arg5[%c0_12, %c0_13] : memref<256x128xbf16, #tpu.memory_space<vmem>>, vector<256x128xbf16>
      tpu.vector_store %arg5[%c0_12, %c0_13], %13 {strides = array<i32>} : memref<256x128xbf16, #tpu.memory_space<vmem>>, vector<256x128xbf16>,
    } else {
    }
    return
  }
  func.func @transform_0(%arg0: i32, %arg1: i32, %arg2: i32) -> (i32, i32) {
    %c0_i32 = arith.constant 0 : i32
    return %arg0, %arg2 : i32, i32
  }
  func.func @transform_1(%arg0: i32, %arg1: i32, %arg2: i32) -> (i32, i32) {
    %c0_i32 = arith.constant 0 : i32
    return %arg2, %arg1 : i32, i32
  }
  func.func @transform_2(%arg0: i32, %arg1: i32, %arg2: i32) -> (i32, i32) {
    %c0_i32 = arith.constant 0 : i32
    return %arg0, %arg1 : i32, i32
  }
}

</mosaic_0001>

<llo_original>
// kernel: _matmul_impl.1
$region0: #{_matmul_impl.1}
  #allocation0 [shape = 'u32[]', space=smem, size = 0x4, offset = 0x4, fixed_abs, tag = 'smem constant byte address 0x4 - core index']
  #allocation1 [shape = 'u32[144,128]{1,0:T(1,128)}', space=vmem, size = 0x12000, scoped, tag = 'internal scratch']
  #allocation2 [shape = 'f32[256,128]{1,0:T(8,128)}', space=vmem, size = 0x20000, scoped, tag = 'scratch operand']
  %s0 = inlined_call_operand.vmem [shape: bf16[1024,256], index: 0, kind: input, shape index: {}]
  %s1 = inlined_call_operand.vmem [shape: bf16[256,128], index: 1, kind: input, shape index: {}]
  %s2 = inlined_call_operand.vmem [shape: bf16[1024,128], index: 2, kind: output, shape index: {}]
  %s3 = sld [smem:[#allocation0]]
  $region49: #{_matmul_impl.1} parent=0
    _
  %s5 = ssub.s32 1, %s3
  %s6 = scalar_select 0, %s5, %s3
  loop: start=0, step=1, limit=6
  $region2: #{_matmul_impl.1} parent=0 // loop_pre_header
    _
  $region3: #{_matmul_impl.1} parent=0 // loop_header
    %s8 = sphi 0, %s12
    %p9 = scmp.ge.s32.totalorder %s8, 6
    %s15 = sphi 0, %s34
    %s16 = sphi 0, %s30
    %s17 = sphi 0, %s26
    %s18 = sphi 0, %s15
    %s19 = sphi 0, %s16
    %s20 = sphi 0, %s17
    %s21 = sphi 0, %s18
    %s22 = sphi 0, %s19
    %s23 = sphi 0, %s20
    %s39 = sphi 0, %s41
    %s42 = sphi 0, %s39
    %s43 = sphi 0, %s42
    %s59 = sphi 0, %s43
    %s67 = sphi 0, %s69
    %s70 = sphi 0, %s67
    %s71 = sphi 0, %s70
    %s87 = sphi 0, %s71
    %s95 = sphi 0, %s97
    %s98 = sphi 0, %s95
    %s99 = sphi 0, %s98
    %s115 = sphi 0, %s99
  $region4: #{_matmul_impl.1} parent=0 // loop_header_branch
    %11 = sbr.rel (%p9) target = $region8
  $region5: #{_matmul_impl.1} parent=0 // loop_body
    %s13 = ssub.s32 %s8, 1
    %s14 = ssub.s32 %s8, 2
    %s24 = sadd.s32 1, %s17
    %p25 = scmp.ge.s32.totalorder %s24, 1
    %s26 = scalar_select %p25, 0, %s24
    %s27 = sadd.s32 1, %s16
    %s28 = scalar_select %p25, %s27, %s16
    %p29 = scmp.ge.s32.totalorder %s28, 1
    %s30 = scalar_select %p29, 0, %s28
    %s31 = sadd.s32 1, %s15
    %s32 = scalar_select %p29, %s31, %s15
    %p33 = scmp.ge.s32.totalorder %s32, 4
    %s34 = scalar_select %p33, 0, %s32
    %s35 = ssub.s32 %s15, %s34
    %s36 = ssub.s32 %s17, %s26
    %s37 = sor.u32 %s35, %s36
    %p38 = scmp.eq.s32.totalorder %s37, 0
    %s40 = sadd.s32 %s39, 1
    %s41 = scalar_select %p38, %s39, %s40
    %p44 = pneg %p38
    %p45 = scmp.eq.s32.totalorder %s8, 3
    %p46 = por %p44, %p45
    %p47 = scmp.ne.s32.totalorder %s39, %s42
    %p48 = scmp.eq.s32.totalorder %s8, 0
    %p49 = por %p47, %p48
    %p50 = scmp.ne.s32.totalorder %s39, %s42
    %p51 = scmp.eq.s32.totalorder %s13, 3
    %p52 = por %p50, %p51
    %p53 = scmp.ne.s32.totalorder %s42, %s43
    %p54 = scmp.eq.s32.totalorder %s13, 0
    %p55 = por %p53, %p54
    %p56 = scmp.ne.s32.totalorder %s42, %s43
    %p57 = scmp.eq.s32.totalorder %s14, 3
    %p58 = por %p56, %p57
    %p60 = scmp.ne.s32.totalorder %s43, %s59
    %p61 = scmp.eq.s32.totalorder %s14, 0
    %p62 = por %p60, %p61
    %s63 = ssub.s32 %s17, %s26
    %s64 = ssub.s32 %s16, %s30
    %s65 = sor.u32 %s63, %s64
    %p66 = scmp.eq.s32.totalorder %s65, 0
    %s68 = sadd.s32 %s67, 1
    %s69 = scalar_select %p66, %s67, %s68
    %p72 = pneg %p66
    %p73 = scmp.eq.s32.totalorder %s8, 3
    %p74 = por %p72, %p73
    %p75 = scmp.ne.s32.totalorder %s67, %s70
    %p76 = scmp.eq.s32.totalorder %s8, 0
    %p77 = por %p75, %p76
    %p78 = scmp.ne.s32.totalorder %s67, %s70
    %p79 = scmp.eq.s32.totalorder %s13, 3
    %p80 = por %p78, %p79
    %p81 = scmp.ne.s32.totalorder %s70, %s71
    %p82 = scmp.eq.s32.totalorder %s13, 0
    %p83 = por %p81, %p82
    %p84 = scmp.ne.s32.totalorder %s70, %s71
    %p85 = scmp.eq.s32.totalorder %s14, 3
    %p86 = por %p84, %p85
    %p88 = scmp.ne.s32.totalorder %s71, %s87
    %p89 = scmp.eq.s32.totalorder %s14, 0
    %p90 = por %p88, %p89
    %s91 = ssub.s32 %s15, %s34
    %s92 = ssub.s32 %s16, %s30
    %s93 = sor.u32 %s91, %s92
    %p94 = scmp.eq.s32.totalorder %s93, 0
    %s96 = sadd.s32 %s95, 1
    %s97 = scalar_select %p94, %s95, %s96
    %p100 = pneg %p94
    %p101 = scmp.eq.s32.totalorder %s8, 3
    %p102 = por %p100, %p101
    %p103 = scmp.ne.s32.totalorder %s95, %s98
    %p104 = scmp.eq.s32.totalorder %s8, 0
    %p105 = por %p103, %p104
    %p106 = scmp.ne.s32.totalorder %s95, %s98
    %p107 = scmp.eq.s32.totalorder %s13, 3
    %p108 = por %p106, %p107
    %p109 = scmp.ne.s32.totalorder %s98, %s99
    %p110 = scmp.eq.s32.totalorder %s13, 0
    %p111 = por %p109, %p110
    %p112 = scmp.ne.s32.totalorder %s98, %s99
    %p113 = scmp.eq.s32.totalorder %s14, 3
    %p114 = por %p112, %p113
    %p116 = scmp.ne.s32.totalorder %s99, %s115
    %p117 = scmp.eq.s32.totalorder %s14, 0
    %p118 = por %p116, %p117
    %p119 = scmp.le.s32.totalorder 1, %s8
    %p120 = scmp.lt.s32.totalorder %s8, 5
    %p121 = pnand %p119, %p120
    %p122 = pneg %p121
    // Predicated region
    $region9: #{_matmul_impl.1} parent=5 // pred_check
      _
    $region10: #{_matmul_impl.1} parent=5 // pred_check_branch
      %124 = sbr.rel (%p121) target = $region12
    $region11: #{_matmul_impl.1} parent=5 // pred_region
      %s125 = ssub.s32 %s8, 1
      // Predicated region
      $region13: #{_matmul_impl.1} parent=11 // pred_check
        %p126 = pneg %p83
      $region14: #{_matmul_impl.1} parent=11 // pred_check_branch
        %128 = sbr.rel (%p126) target = $region16
      $region15: #{_matmul_impl.1} parent=11 // pred_region
        %s129 = smul.u32 32, %s20
        %p130 = scmp.lt.s32.totalorder %s129, 31
        %s131 = scalar_select %p130, %s129, 31
        %p132 = scmp.lt.s32.totalorder %s19, 0
        %s133 = scalar_select %p132, %s19, 0
        %s134 = sadd.s32 %s133, %s131
        %s135 = smul.addr %s134, 4
        %s136 = scalar_lea.vmem %s1, %s135
        %s137 = smul.u32 32, %s20
      $region16: #{_matmul_impl.1} parent=11 // pred_fallthru
        _
    $region12: #{_matmul_impl.1} parent=5 // pred_fallthru
      _
    %p138 = scmp.lt.s32.totalorder %s8, 4
    // Predicated region
    $region17: #{_matmul_impl.1} parent=5 // pred_check
      %p139 = pneg %p138
    $region18: #{_matmul_impl.1} parent=5 // pred_check_branch
      %141 = sbr.rel (%p139) target = $region20
    $region19: #{_matmul_impl.1} parent=5 // pred_region
      // Predicated region
      $region21: #{_matmul_impl.1} parent=19 // pred_check
        %p142 = pneg %p49
      $region22: #{_matmul_impl.1} parent=19 // pred_check_branch
        %144 = sbr.rel (%p142) target = $region24
      $region23: #{_matmul_impl.1} parent=19 // pred_region
        %s145 = smul.u32 32, %s15
        %s146 = smul.u32 2, %s17
        %p147 = scmp.lt.s32.totalorder %s145, 127
        %s148 = scalar_select %p147, %s145, 127
        %p149 = scmp.lt.s32.totalorder %s146, 1
        %s150 = scalar_select %p149, %s146, 1
        %s151 = smul.addr %s148, 2
        %s152 = sadd.s32 %s150, %s151
        %s153 = smul.addr %s152, 4
        %s154 = scalar_lea.vmem %s0, %s153
        %s155 = smul.u32 32, %s15
        %s156 = smul.u32 2, %s17
      $region24: #{_matmul_impl.1} parent=19 // pred_fallthru
        _
    $region20: #{_matmul_impl.1} parent=5 // pred_fallthru
      _
    %p157 = scmp.le.s32.totalorder 1, %s8
    %p158 = scmp.lt.s32.totalorder %s8, 5
    %p159 = pnand %p157, %p158
    %p160 = pneg %p159
    // Predicated region
    $region25: #{_matmul_impl.1} parent=5 // pred_check
      _
    $region26: #{_matmul_impl.1} parent=5 // pred_check_branch
      %162 = sbr.rel (%p159) target = $region28
    $region27: #{_matmul_impl.1} parent=5 // pred_region
      %s163 = ssub.s32 %s8, 1
      %s164 = smul.u32 32, %s18
      %s165 = smul.u32 2, %s20
      %p166 = scmp.lt.s32.totalorder %s164, 127
      %s167 = scalar_select %p166, %s164, 127
      %p168 = scmp.lt.s32.totalorder %s165, 1
      %s169 = scalar_select %p168, %s165, 1
      %s170 = smul.addr %s167, 2
      %s171 = sadd.s32 %s169, %s170
      %s172 = smul.addr %s171, 4
      %s173 = scalar_lea.vmem %s0, %s172
      %p174 = pneg %p55
      %p175 = pneg %p52
      %s176 = smul.u32 32, %s20
      %p177 = scmp.lt.s32.totalorder %s176, 31
      %s178 = scalar_select %p177, %s176, 31
      %p179 = scmp.lt.s32.totalorder %s19, 0
      %s180 = scalar_select %p179, %s19, 0
      %s181 = sadd.s32 %s180, %s178
      %s182 = smul.addr %s181, 4
      %s183 = scalar_lea.vmem %s1, %s182
      %p184 = pneg %p83
      %p185 = pneg %p80
      %p186 = pneg %p111
      %p187 = pneg %p108
      %s188 = smul.u32 32, %s18
      %p189 = scmp.lt.s32.totalorder %s188, 127
      %s190 = scalar_select %p189, %s188, 127
      %p191 = scmp.lt.s32.totalorder %s19, 0
      %s192 = scalar_select %p191, %s19, 0
      %s193 = sadd.s32 %s192, %s190
      %s194 = smul.addr %s193, 4
      %s195 = scalar_lea.vmem %s2, %s194
      %s196 = smul.u32 32, %s18
      %s197 = smul.u32 2, %s20
      %p198 = scmp.lt.s32.totalorder %s196, 127
      %s199 = scalar_select %p198, %s196, 127
      %p200 = scmp.lt.s32.totalorder %s197, 1
      %s201 = scalar_select %p200, %s197, 1
      %s202 = smul.addr %s199, 2
      %s203 = sadd.s32 %s201, %s202
      %s204 = smul.addr %s203, 4
      %s205 = scalar_lea.vmem %s0, %s204
      %s206 = smul.u32 32, %s18
      %s207 = smul.u32 2, %s20
      %s208 = smul.u32 32, %s20
      %p209 = scmp.lt.s32.totalorder %s208, 31
      %s210 = scalar_select %p209, %s208, 31
      %p211 = scmp.lt.s32.totalorder %s19, 0
      %s212 = scalar_select %p211, %s19, 0
      %s213 = sadd.s32 %s212, %s210
      %s214 = smul.addr %s213, 4
      %s215 = scalar_lea.vmem %s1, %s214
      %s216 = smul.u32 32, %s20
      %s217 = smul.u32 32, %s18
      %p218 = scmp.lt.s32.totalorder %s217, 127
      %s219 = scalar_select %p218, %s217, 127
      %p220 = scmp.lt.s32.totalorder %s19, 0
      %s221 = scalar_select %p220, %s19, 0
      %s222 = sadd.s32 %s221, %s219
      %s223 = smul.addr %s222, 4
      %s224 = scalar_lea.vmem %s2, %s223
      %s225 = smul.u32 32, %s18
      %p227 = scmp.eq.s32.totalorder %s20, 0
      // Predicated region
      $region29: #{_matmul_impl.1} parent=27 // pred_check
        %p228 = pneg %p227
      $region30: #{_matmul_impl.1} parent=27 // pred_check_branch
        %230 = sbr.rel (%p228) target = $region32
      $region31: #{_matmul_impl.1} parent=27 // pred_region
        %231 = vst [vmem:[#allocation2] sm:$0xff] 0.0
        %232 = vst [vmem:[#allocation2 + $0x8] sm:$0xff] 0.0
        %233 = vst [vmem:[#allocation2 + $0x10] sm:$0xff] 0.0
        %234 = vst [vmem:[#allocation2 + $0x18] sm:$0xff] 0.0
        %235 = vst [vmem:[#allocation2 + $0x20] sm:$0xff] 0.0
        %236 = vst [vmem:[#allocation2 + $0x28] sm:$0xff] 0.0
        %237 = vst [vmem:[#allocation2 + $0x30] sm:$0xff] 0.0
        %238 = vst [vmem:[#allocation2 + $0x38] sm:$0xff] 0.0
        %239 = vst [vmem:[#allocation2 + $0x40] sm:$0xff] 0.0
        %240 = vst [vmem:[#allocation2 + $0x48] sm:$0xff] 0.0
        %241 = vst [vmem:[#allocation2 + $0x50] sm:$0xff] 0.0
        %242 = vst [vmem:[#allocation2 + $0x58] sm:$0xff] 0.0
        %243 = vst [vmem:[#allocation2 + $0x60] sm:$0xff] 0.0
        %244 = vst [vmem:[#allocation2 + $0x68] sm:$0xff] 0.0
        %245 = vst [vmem:[#allocation2 + $0x70] sm:$0xff] 0.0
        %246 = vst [vmem:[#allocation2 + $0x78] sm:$0xff] 0.0
        %247 = vst [vmem:[#allocation2 + $0x80] sm:$0xff] 0.0
        %248 = vst [vmem:[#allocation2 + $0x88] sm:$0xff] 0.0
        %249 = vst [vmem:[#allocation2 + $0x90] sm:$0xff] 0.0
        %250 = vst [vmem:[#allocation2 + $0x98] sm:$0xff] 0.0
        %251 = vst [vmem:[#allocation2 + $0xa0] sm:$0xff] 0.0
        %252 = vst [vmem:[#allocation2 + $0xa8] sm:$0xff] 0.0
        %253 = vst [vmem:[#allocation2 + $0xb0] sm:$0xff] 0.0
        %254 = vst [vmem:[#allocation2 + $0xb8] sm:$0xff] 0.0
        %255 = vst [vmem:[#allocation2 + $0xc0] sm:$0xff] 0.0
        %256 = vst [vmem:[#allocation2 + $0xc8] sm:$0xff] 0.0
        %257 = vst [vmem:[#allocation2 + $0xd0] sm:$0xff] 0.0
        %258 = vst [vmem:[#allocation2 + $0xd8] sm:$0xff] 0.0
        %259 = vst [vmem:[#allocation2 + $0xe0] sm:$0xff] 0.0
        %260 = vst [vmem:[#allocation2 + $0xe8] sm:$0xff] 0.0
        %261 = vst [vmem:[#allocation2 + $0xf0] sm:$0xff] 0.0
        %262 = vst [vmem:[#allocation2 + $0xf8] sm:$0xff] 0.0
      $region32: #{_matmul_impl.1} parent=27 // pred_fallthru
        _
      %v263 = vld [vmem:[#allocation2] sm:$0xff]
      %v264 = vld [vmem:[#allocation2 + $0x8] sm:$0xff]
      %v265 = vld [vmem:[#allocation2 + $0x10] sm:$0xff]
      %v266 = vld [vmem:[#allocation2 + $0x18] sm:$0xff]
      %v267 = vld [vmem:[#allocation2 + $0x20] sm:$0xff]
      %v268 = vld [vmem:[#allocation2 + $0x28] sm:$0xff]
      %v269 = vld [vmem:[#allocation2 + $0x30] sm:$0xff]
      %v270 = vld [vmem:[#allocation2 + $0x38] sm:$0xff]
      %v271 = vld [vmem:[#allocation2 + $0x40] sm:$0xff]
      %v272 = vld [vmem:[#allocation2 + $0x48] sm:$0xff]
      %v273 = vld [vmem:[#allocation2 + $0x50] sm:$0xff]
      %v274 = vld [vmem:[#allocation2 + $0x58] sm:$0xff]
      %v275 = vld [vmem:[#allocation2 + $0x60] sm:$0xff]
      %v276 = vld [vmem:[#allocation2 + $0x68] sm:$0xff]
      %v277 = vld [vmem:[#allocation2 + $0x70] sm:$0xff]
      %v278 = vld [vmem:[#allocation2 + $0x78] sm:$0xff]
      %v279 = vld [vmem:[#allocation2 + $0x80] sm:$0xff]
      %v280 = vld [vmem:[#allocation2 + $0x88] sm:$0xff]
      %v281 = vld [vmem:[#allocation2 + $0x90] sm:$0xff]
      %v282 = vld [vmem:[#allocation2 + $0x98] sm:$0xff]
      %v283 = vld [vmem:[#allocation2 + $0xa0] sm:$0xff]
      %v284 = vld [vmem:[#allocation2 + $0xa8] sm:$0xff]
      %v285 = vld [vmem:[#allocation2 + $0xb0] sm:$0xff]
      %v286 = vld [vmem:[#allocation2 + $0xb8] sm:$0xff]
      %v287 = vld [vmem:[#allocation2 + $0xc0] sm:$0xff]
      %v288 = vld [vmem:[#allocation2 + $0xc8] sm:$0xff]
      %v289 = vld [vmem:[#allocation2 + $0xd0] sm:$0xff]
      %v290 = vld [vmem:[#allocation2 + $0xd8] sm:$0xff]
      %v291 = vld [vmem:[#allocation2 + $0xe0] sm:$0xff]
      %v292 = vld [vmem:[#allocation2 + $0xe8] sm:$0xff]
      %v293 = vld [vmem:[#allocation2 + $0xf0] sm:$0xff]
      %v294 = vld [vmem:[#allocation2 + $0xf8] sm:$0xff]
      %v295 = vld [vmem:[%s205] sm:$0xff]
      %v296 = vld [vmem:[%s205 + $0x8] sm:$0xff]
      %v297 = vld [vmem:[%s205 + $0x10] sm:$0xff]
      %v298 = vld [vmem:[%s205 + $0x18] sm:$0xff]
      %v299 = vld [vmem:[%s205 + $0x20] sm:$0xff]
      %v300 = vld [vmem:[%s205 + $0x28] sm:$0xff]
      %v301 = vld [vmem:[%s205 + $0x30] sm:$0xff]
      %v302 = vld [vmem:[%s205 + $0x38] sm:$0xff]
      %v303 = vld [vmem:[%s205 + $0x40] sm:$0xff]
      %v304 = vld [vmem:[%s205 + $0x48] sm:$0xff]
      %v305 = vld [vmem:[%s205 + $0x50] sm:$0xff]
      %v306 = vld [vmem:[%s205 + $0x58] sm:$0xff]
      %v307 = vld [vmem:[%s205 + $0x60] sm:$0xff]
      %v308 = vld [vmem:[%s205 + $0x68] sm:$0xff]
      %v309 = vld [vmem:[%s205 + $0x70] sm:$0xff]
      %v310 = vld [vmem:[%s205 + $0x78] sm:$0xff]
      %v311 = vld [vmem:[%s205 + $0x80] sm:$0xff]
      %v312 = vld [vmem:[%s205 + $0x88] sm:$0xff]
      %v313 = vld [vmem:[%s205 + $0x90] sm:$0xff]
      %v314 = vld [vmem:[%s205 + $0x98] sm:$0xff]
      %v315 = vld [vmem:[%s205 + $0xa0] sm:$0xff]
      %v316 = vld [vmem:[%s205 + $0xa8] sm:$0xff]
      %v317 = vld [vmem:[%s205 + $0xb0] sm:$0xff]
      %v318 = vld [vmem:[%s205 + $0xb8] sm:$0xff]
      %v319 = vld [vmem:[%s205 + $0xc0] sm:$0xff]
      %v320 = vld [vmem:[%s205 + $0xc8] sm:$0xff]
      %v321 = vld [vmem:[%s205 + $0xd0] sm:$0xff]
      %v322 = vld [vmem:[%s205 + $0xd8] sm:$0xff]
      %v323 = vld [vmem:[%s205 + $0xe0] sm:$0xff]
      %v324 = vld [vmem:[%s205 + $0xe8] sm:$0xff]
      %v325 = vld [vmem:[%s205 + $0xf0] sm:$0xff]
      %v326 = vld [vmem:[%s205 + $0xf8] sm:$0xff]
      %v327 = vld [vmem:[%s215] sm:$0xf]
      %v328 = vld [vmem:[%s215 + $0x4] sm:$0xf]
      %v329 = vld [vmem:[%s215 + $0x8] sm:$0xf]
      %v330 = vld [vmem:[%s215 + $0xc] sm:$0xf]
      %v331 = vld [vmem:[%s215 + $0x10] sm:$0xf]
      %v332 = vld [vmem:[%s215 + $0x14] sm:$0xf]
      %v333 = vld [vmem:[%s215 + $0x18] sm:$0xf]
      %v334 = vld [vmem:[%s215 + $0x1c] sm:$0xf]
      %v335 = vld [vmem:[%s215 + $0x20] sm:$0xf]
      %v336 = vld [vmem:[%s215 + $0x24] sm:$0xf]
      %v337 = vld [vmem:[%s215 + $0x28] sm:$0xf]
      %v338 = vld [vmem:[%s215 + $0x2c] sm:$0xf]
      %v339 = vld [vmem:[%s215 + $0x30] sm:$0xf]
      %v340 = vld [vmem:[%s215 + $0x34] sm:$0xf]
      %v341 = vld [vmem:[%s215 + $0x38] sm:$0xf]
      %v342 = vld [vmem:[%s215 + $0x3c] sm:$0xf]
      %v343 = vld [vmem:[%s215 + $0x40] sm:$0xf]
      %v344 = vld [vmem:[%s215 + $0x44] sm:$0xf]
      %v345 = vld [vmem:[%s215 + $0x48] sm:$0xf]
      %v346 = vld [vmem:[%s215 + $0x4c] sm:$0xf]
      %v347 = vld [vmem:[%s215 + $0x50] sm:$0xf]
      %v348 = vld [vmem:[%s215 + $0x54] sm:$0xf]
      %v349 = vld [vmem:[%s215 + $0x58] sm:$0xf]
      %v350 = vld [vmem:[%s215 + $0x5c] sm:$0xf]
      %v351 = vld [vmem:[%s215 + $0x60] sm:$0xf]
      %v352 = vld [vmem:[%s215 + $0x64] sm:$0xf]
      %v353 = vld [vmem:[%s215 + $0x68] sm:$0xf]
      %v354 = vld [vmem:[%s215 + $0x6c] sm:$0xf]
      %v355 = vld [vmem:[%s215 + $0x70] sm:$0xf]
      %v356 = vld [vmem:[%s215 + $0x74] sm:$0xf]
      %v357 = vld [vmem:[%s215 + $0x78] sm:$0xf]
      %v358 = vld [vmem:[%s215 + $0x7c] sm:$0xf]
      %v391 = vunpack.c.l.b16 %v295
      %v392 = vunpack.c.h.b16 %v295
      %v393 = vunpack.c.l.b16 %v296
      %v394 = vunpack.c.h.b16 %v296
      %v395 = vunpack.c.l.b16 %v297
      %v396 = vunpack.c.h.b16 %v297
      %v397 = vunpack.c.l.b16 %v298
      %v398 = vunpack.c.h.b16 %v298
      %v399 = vunpack.c.l.b16 %v299
      %v400 = vunpack.c.h.b16 %v299
      %v401 = vunpack.c.l.b16 %v300
      %v402 = vunpack.c.h.b16 %v300
      %v403 = vunpack.c.l.b16 %v301
      %v404 = vunpack.c.h.b16 %v301
      %v405 = vunpack.c.l.b16 %v302
      %v406 = vunpack.c.h.b16 %v302
      %v407 = vunpack.c.l.b16 %v303
      %v408 = vunpack.c.h.b16 %v303
      %v409 = vunpack.c.l.b16 %v304
      %v410 = vunpack.c.h.b16 %v304
      %v411 = vunpack.c.l.b16 %v305
      %v412 = vunpack.c.h.b16 %v305
      %v413 = vunpack.c.l.b16 %v306
      %v414 = vunpack.c.h.b16 %v306
      %v415 = vunpack.c.l.b16 %v307
      %v416 = vunpack.c.h.b16 %v307
      %v417 = vunpack.c.l.b16 %v308
      %v418 = vunpack.c.h.b16 %v308
      %v419 = vunpack.c.l.b16 %v309
      %v420 = vunpack.c.h.b16 %v309
      %v421 = vunpack.c.l.b16 %v310
      %v422 = vunpack.c.h.b16 %v310
      %v423 = vunpack.c.l.b16 %v311
      %v424 = vunpack.c.h.b16 %v311
      %v425 = vunpack.c.l.b16 %v312
      %v426 = vunpack.c.h.b16 %v312
      %v427 = vunpack.c.l.b16 %v313
      %v428 = vunpack.c.h.b16 %v313
      %v429 = vunpack.c.l.b16 %v314
      %v430 = vunpack.c.h.b16 %v314
      %v431 = vunpack.c.l.b16 %v315
      %v432 = vunpack.c.h.b16 %v315
      %v433 = vunpack.c.l.b16 %v316
      %v434 = vunpack.c.h.b16 %v316
      %v435 = vunpack.c.l.b16 %v317
      %v436 = vunpack.c.h.b16 %v317
      %v437 = vunpack.c.l.b16 %v318
      %v438 = vunpack.c.h.b16 %v318
      %v439 = vunpack.c.l.b16 %v319
      %v440 = vunpack.c.h.b16 %v319
      %v441 = vunpack.c.l.b16 %v320
      %v442 = vunpack.c.h.b16 %v320
      %v443 = vunpack.c.l.b16 %v321
      %v444 = vunpack.c.h.b16 %v321
      %v445 = vunpack.c.l.b16 %v322
      %v446 = vunpack.c.h.b16 %v322
      %v447 = vunpack.c.l.b16 %v323
      %v448 = vunpack.c.h.b16 %v323
      %v449 = vunpack.c.l.b16 %v324
      %v450 = vunpack.c.h.b16 %v324
      %v451 = vunpack.c.l.b16 %v325
      %v452 = vunpack.c.h.b16 %v325
      %v453 = vunpack.c.l.b16 %v326
      %v454 = vunpack.c.h.b16 %v326
      %v455 = vpack.c.b16 %v393, %v391
      %v456 = vpack.c.b16 %v394, %v392
      %v457 = vpack.c.b16 %v397, %v395
      %v458 = vpack.c.b16 %v398, %v396
      %v459 = vpack.c.b16 %v401, %v399
      %v460 = vpack.c.b16 %v402, %v400
      %v461 = vpack.c.b16 %v405, %v403
      %v462 = vpack.c.b16 %v406, %v404
      %v463 = vpack.c.b16 %v409, %v407
      %v464 = vpack.c.b16 %v410, %v408
      %v465 = vpack.c.b16 %v413, %v411
      %v466 = vpack.c.b16 %v414, %v412
      %v467 = vpack.c.b16 %v417, %v415
      %v468 = vpack.c.b16 %v418, %v416
      %v469 = vpack.c.b16 %v421, %v419
      %v470 = vpack.c.b16 %v422, %v420
      %v471 = vpack.c.b16 %v425, %v423
      %v472 = vpack.c.b16 %v426, %v424
      %v473 = vpack.c.b16 %v429, %v427
      %v474 = vpack.c.b16 %v430, %v428
      %v475 = vpack.c.b16 %v433, %v431
      %v476 = vpack.c.b16 %v434, %v432
      %v477 = vpack.c.b16 %v437, %v435
      %v478 = vpack.c.b16 %v438, %v436
      %v479 = vpack.c.b16 %v441, %v439
      %v480 = vpack.c.b16 %v442, %v440
      %v481 = vpack.c.b16 %v445, %v443
      %v482 = vpack.c.b16 %v446, %v444
      %v483 = vpack.c.b16 %v449, %v447
      %v484 = vpack.c.b16 %v450, %v448
      %v485 = vpack.c.b16 %v453, %v451
      %v486 = vpack.c.b16 %v454, %v452
      %v551 = vunpack.c.l.b16 %v327
      %v552 = vunpack.c.l.b16 %v328
      %v553 = vunpack.c.l.b16 %v329
      %v554 = vunpack.c.l.b16 %v330
      %v555 = vunpack.c.l.b16 %v331
      %v556 = vunpack.c.l.b16 %v332
      %v557 = vunpack.c.l.b16 %v333
      %v558 = vunpack.c.l.b16 %v334
      %v559 = vunpack.c.l.b16 %v335
      %v560 = vunpack.c.l.b16 %v336
      %v561 = vunpack.c.l.b16 %v337
      %v562 = vunpack.c.l.b16 %v338
      %v563 = vunpack.c.l.b16 %v339
      %v564 = vunpack.c.l.b16 %v340
      %v565 = vunpack.c.l.b16 %v341
      %v566 = vunpack.c.l.b16 %v342
      %v567 = vunpack.c.l.b16 %v343
      %v568 = vunpack.c.l.b16 %v344
      %v569 = vunpack.c.l.b16 %v345
      %v570 = vunpack.c.l.b16 %v346
      %v571 = vunpack.c.l.b16 %v347
      %v572 = vunpack.c.l.b16 %v348
      %v573 = vunpack.c.l.b16 %v349
      %v574 = vunpack.c.l.b16 %v350
      %v575 = vunpack.c.l.b16 %v351
      %v576 = vunpack.c.l.b16 %v352
      %v577 = vunpack.c.l.b16 %v353
      %v578 = vunpack.c.l.b16 %v354
      %v579 = vunpack.c.l.b16 %v355
      %v580 = vunpack.c.l.b16 %v356
      %v581 = vunpack.c.l.b16 %v357
      %v582 = vunpack.c.l.b16 %v358
      %v583 = vpack.c.b16 %v552, %v551
      %v584 = vpack.c.b16 %v554, %v553
      %v585 = vpack.c.b16 %v556, %v555
      %v586 = vpack.c.b16 %v558, %v557
      %v587 = vpack.c.b16 %v560, %v559
      %v588 = vpack.c.b16 %v562, %v561
      %v589 = vpack.c.b16 %v564, %v563
      %v590 = vpack.c.b16 %v566, %v565
      %v591 = vpack.c.b16 %v568, %v567
      %v592 = vpack.c.b16 %v570, %v569
      %v593 = vpack.c.b16 %v572, %v571
      %v594 = vpack.c.b16 %v574, %v573
      %v595 = vpack.c.b16 %v576, %v575
      %v596 = vpack.c.b16 %v578, %v577
      %v597 = vpack.c.b16 %v580, %v579
      %v598 = vpack.c.b16 %v582, %v581
      %615 = vmatprep.subr.bf16.mxu0 0
      %616 = vmatpush1.bf16.msra.mxu0 %v583
      %617 = vmatprep.subr.bf16.mxu0 0
      %618 = vmatpush1.bf16.msra.mxu0 %v584
      %619 = vmatprep.subr.bf16.mxu0 0
      %620 = vmatpush1.bf16.msra.mxu0 %v585
      %621 = vmatprep.subr.bf16.mxu0 0
      %622 = vmatpush1.bf16.msra.mxu0 %v586
      %623 = vmatprep.subr.bf16.mxu0 0
      %624 = vmatpush1.bf16.msra.mxu0 %v587
      %625 = vmatprep.subr.bf16.mxu0 0
      %626 = vmatpush1.bf16.msra.mxu0 %v588
      %627 = vmatprep.subr.bf16.mxu0 0
      %628 = vmatpush1.bf16.msra.mxu0 %v589
      %629 = vmatprep.subr.bf16.mxu0 0
      %630 = vmatpush1.bf16.msra.mxu0 %v590
      %631 = vmatprep.subr.bf16.mxu0 0
      %632 = vmatpush1.bf16.msra.mxu0 %v591
      %633 = vmatprep.subr.bf16.mxu0 0
      %634 = vmatpush1.bf16.msra.mxu0 %v592
      %635 = vmatprep.subr.bf16.mxu0 0
      %636 = vmatpush1.bf16.msra.mxu0 %v593
      %637 = vmatprep.subr.bf16.mxu0 0
      %638 = vmatpush1.bf16.msra.mxu0 %v594
      %639 = vmatprep.subr.bf16.mxu0 0
      %640 = vmatpush1.bf16.msra.mxu0 %v595
      %641 = vmatprep.subr.bf16.mxu0 0
      %642 = vmatpush1.bf16.msra.mxu0 %v596
      %643 = vmatprep.subr.bf16.mxu0 0
      %644 = vmatpush1.bf16.msra.mxu0 %v597
      %645 = vmatprep.subr.bf16.mxu0 0
      %646 = vmatpush1.bf16.msra.mxu0 %v598
      %647 = vmatprep.mubr.bf16.mxu0 %v456
      %648 = vmatmul.mubr.bf16.gmra.mrb[0].mxu0 %v455
      %v649 = vpop.f32.mrb[0].mxu0
      %v650 = vadd.f32 0.0, %v649
      %v651 = vpop.f32.mrb[0].mxu0
      %v652 = vpop.f32.mrb[0].mxu0
      %v653 = vadd.f32 0.0, %v652
      %v654 = vpop.f32.mrb[0].mxu0
      %655 = vmatprep.mubr.bf16.mxu0 %v458
      %656 = vmatmul.mubr.bf16.gmra.mrb[0].mxu0 %v457
      %v657 = vpop.f32.mrb[0].mxu0
      %v658 = vadd.f32 0.0, %v657
      %v659 = vpop.f32.mrb[0].mxu0
      %v660 = vpop.f32.mrb[0].mxu0
      %v661 = vadd.f32 0.0, %v660
      %v662 = vpop.f32.mrb[0].mxu0
      %663 = vmatprep.mubr.bf16.mxu0 %v460
      %664 = vmatmul.mubr.bf16.gmra.mrb[0].mxu0 %v459
      %v665 = vpop.f32.mrb[0].mxu0
      %v666 = vadd.f32 0.0, %v665
      %v667 = vpop.f32.mrb[0].mxu0
      %v668 = vpop.f32.mrb[0].mxu0
      %v669 = vadd.f32 0.0, %v668
      %v670 = vpop.f32.mrb[0].mxu0
      %671 = vmatprep.mubr.bf16.mxu0 %v462
      %672 = vmatmul.mubr.bf16.gmra.mrb[0].mxu0 %v461
      %v673 = vpop.f32.mrb[0].mxu0
      %v674 = vadd.f32 0.0, %v673
      %v675 = vpop.f32.mrb[0].mxu0
      %v676 = vpop.f32.mrb[0].mxu0
      %v677 = vadd.f32 0.0, %v676
      %v678 = vpop.f32.mrb[0].mxu0
      %679 = vmatprep.mubr.bf16.mxu0 %v464
      %680 = vmatmul.mubr.bf16.gmra.mrb[0].mxu0 %v463
      %v681 = vpop.f32.mrb[0].mxu0
      %v682 = vadd.f32 0.0, %v681
      %v683 = vpop.f32.mrb[0].mxu0
      %v684 = vpop.f32.mrb[0].mxu0
      %v685 = vadd.f32 0.0, %v684
      %v686 = vpop.f32.mrb[0].mxu0
      %687 = vmatprep.mubr.bf16.mxu0 %v466
      %688 = vmatmul.mubr.bf16.gmra.mrb[0].mxu0 %v465
      %v689 = vpop.f32.mrb[0].mxu0
      %v690 = vadd.f32 0.0, %v689
      %v691 = vpop.f32.mrb[0].mxu0
      %v692 = vpop.f32.mrb[0].mxu0
      %v693 = vadd.f32 0.0, %v692
      %v694 = vpop.f32.mrb[0].mxu0
      %695 = vmatprep.mubr.bf16.mxu0 %v468
      %696 = vmatmul.mubr.bf16.gmra.mrb[0].mxu0 %v467
      %v697 = vpop.f32.mrb[0].mxu0
      %v698 = vadd.f32 0.0, %v697
      %v699 = vpop.f32.mrb[0].mxu0
      %v700 = vpop.f32.mrb[0].mxu0
      %v701 = vadd.f32 0.0, %v700
      %v702 = vpop.f32.mrb[0].mxu0
      %703 = vmatprep.mubr.bf16.mxu0 %v470
      %704 = vmatmul.mubr.bf16.gmra.mrb[0].mxu0 %v469
      %v705 = vpop.f32.mrb[0].mxu0
      %v706 = vadd.f32 0.0, %v705
      %v707 = vpop.f32.mrb[0].mxu0
      %v708 = vpop.f32.mrb[0].mxu0
      %v709 = vadd.f32 0.0, %v708
      %v710 = vpop.f32.mrb[0].mxu0
      %711 = vmatprep.mubr.bf16.mxu0 %v472
      %712 = vmatmul.mubr.bf16.gmra.mrb[0].mxu0 %v471
      %v713 = vpop.f32.mrb[0].mxu0
      %v714 = vadd.f32 0.0, %v713
      %v715 = vpop.f32.mrb[0].mxu0
      %v716 = vpop.f32.mrb[0].mxu0
      %v717 = vadd.f32 0.0, %v716
      %v718 = vpop.f32.mrb[0].mxu0
      %719 = vmatprep.mubr.bf16.mxu0 %v474
      %720 = vmatmul.mubr.bf16.gmra.mrb[0].mxu0 %v473
      %v721 = vpop.f32.mrb[0].mxu0
      %v722 = vadd.f32 0.0, %v721
      %v723 = vpop.f32.mrb[0].mxu0
      %v724 = vpop.f32.mrb[0].mxu0
      %v725 = vadd.f32 0.0, %v724
      %v726 = vpop.f32.mrb[0].mxu0
      %727 = vmatprep.mubr.bf16.mxu0 %v476
      %728 = vmatmul.mubr.bf16.gmra.mrb[0].mxu0 %v475
      %v729 = vpop.f32.mrb[0].mxu0
      %v730 = vadd.f32 0.0, %v729
      %v731 = vpop.f32.mrb[0].mxu0
      %v732 = vpop.f32.mrb[0].mxu0
      %v733 = vadd.f32 0.0, %v732
      %v734 = vpop.f32.mrb[0].mxu0
      %735 = vmatprep.mubr.bf16.mxu0 %v478
      %736 = vmatmul.mubr.bf16.gmra.mrb[0].mxu0 %v477
      %v737 = vpop.f32.mrb[0].mxu0
      %v738 = vadd.f32 0.0, %v737
      %v739 = vpop.f32.mrb[0].mxu0
      %v740 = vpop.f32.mrb[0].mxu0
      %v741 = vadd.f32 0.0, %v740
      %v742 = vpop.f32.mrb[0].mxu0
      %743 = vmatprep.mubr.bf16.mxu0 %v480
      %744 = vmatmul.mubr.bf16.gmra.mrb[0].mxu0 %v479
      %v745 = vpop.f32.mrb[0].mxu0
      %v746 = vadd.f32 0.0, %v745
      %v747 = vpop.f32.mrb[0].mxu0
      %v748 = vpop.f32.mrb[0].mxu0
      %v749 = vadd.f32 0.0, %v748
      %v750 = vpop.f32.mrb[0].mxu0
      %751 = vmatprep.mubr.bf16.mxu0 %v482
      %752 = vmatmul.mubr.bf16.gmra.mrb[0].mxu0 %v481
      %v753 = vpop.f32.mrb[0].mxu0
      %v754 = vadd.f32 0.0, %v753
      %v755 = vpop.f32.mrb[0].mxu0
      %v756 = vpop.f32.mrb[0].mxu0
      %v757 = vadd.f32 0.0, %v756
      %v758 = vpop.f32.mrb[0].mxu0
      %759 = vmatprep.mubr.bf16.mxu0 %v484
      %760 = vmatmul.mubr.bf16.gmra.mrb[0].mxu0 %v483
      %v761 = vpop.f32.mrb[0].mxu0
      %v762 = vadd.f32 0.0, %v761
      %v763 = vpop.f32.mrb[0].mxu0
      %v764 = vpop.f32.mrb[0].mxu0
      %v765 = vadd.f32 0.0, %v764
      %v766 = vpop.f32.mrb[0].mxu0
      %767 = vmatprep.mubr.bf16.mxu0 %v486
      %768 = vmatmul.mubr.bf16.gmra.mrb[0].mxu0 %v485
      %v769 = vpop.f32.mrb[0].mxu0
      %v770 = vadd.f32 0.0, %v769
      %v771 = vpop.f32.mrb[0].mxu0
      %v772 = vpop.f32.mrb[0].mxu0
      %v773 = vadd.f32 0.0, %v772
      %v774 = vpop.f32.mrb[0].mxu0
      %775 = vdwg.mxu0
      %v776 = vadd.f32 %v263, %v650
      %v777 = vadd.f32 %v264, %v653
      %v778 = vadd.f32 %v265, %v658
      %v779 = vadd.f32 %v266, %v661
      %v780 = vadd.f32 %v267, %v666
      %v781 = vadd.f32 %v268, %v669
      %v782 = vadd.f32 %v269, %v674
      %v783 = vadd.f32 %v270, %v677
      %v784 = vadd.f32 %v271, %v682
      %v785 = vadd.f32 %v272, %v685
      %v786 = vadd.f32 %v273, %v690
      %v787 = vadd.f32 %v274, %v693
      %v788 = vadd.f32 %v275, %v698
      %v789 = vadd.f32 %v276, %v701
      %v790 = vadd.f32 %v277, %v706
      %v791 = vadd.f32 %v278, %v709
      %v792 = vadd.f32 %v279, %v714
      %v793 = vadd.f32 %v280, %v717
      %v794 = vadd.f32 %v281, %v722
      %v795 = vadd.f32 %v282, %v725
      %v796 = vadd.f32 %v283, %v730
      %v797 = vadd.f32 %v284, %v733
      %v798 = vadd.f32 %v285, %v738
      %v799 = vadd.f32 %v286, %v741
      %v800 = vadd.f32 %v287, %v746
      %v801 = vadd.f32 %v288, %v749
      %v802 = vadd.f32 %v289, %v754
      %v803 = vadd.f32 %v290, %v757
      %v804 = vadd.f32 %v291, %v762
      %v805 = vadd.f32 %v292, %v765
      %v806 = vadd.f32 %v293, %v770
      %v807 = vadd.f32 %v294, %v773
      %808 = vst [vmem:[#allocation2] sm:$0xff] %v776
      %809 = vst [vmem:[#allocation2 + $0x8] sm:$0xff] %v777
      %810 = vst [vmem:[#allocation2 + $0x10] sm:$0xff] %v778
      %811 = vst [vmem:[#allocation2 + $0x18] sm:$0xff] %v779
      %812 = vst [vmem:[#allocation2 + $0x20] sm:$0xff] %v780
      %813 = vst [vmem:[#allocation2 + $0x28] sm:$0xff] %v781
      %814 = vst [vmem:[#allocation2 + $0x30] sm:$0xff] %v782
      %815 = vst [vmem:[#allocation2 + $0x38] sm:$0xff] %v783
      %816 = vst [vmem:[#allocation2 + $0x40] sm:$0xff] %v784
      %817 = vst [vmem:[#allocation2 + $0x48] sm:$0xff] %v785
      %818 = vst [vmem:[#allocation2 + $0x50] sm:$0xff] %v786
      %819 = vst [vmem:[#allocation2 + $0x58] sm:$0xff] %v787
      %820 = vst [vmem:[#allocation2 + $0x60] sm:$0xff] %v788
      %821 = vst [vmem:[#allocation2 + $0x68] sm:$0xff] %v789
      %822 = vst [vmem:[#allocation2 + $0x70] sm:$0xff] %v790
      %823 = vst [vmem:[#allocation2 + $0x78] sm:$0xff] %v791
      %824 = vst [vmem:[#allocation2 + $0x80] sm:$0xff] %v792
      %825 = vst [vmem:[#allocation2 + $0x88] sm:$0xff] %v793
      %826 = vst [vmem:[#allocation2 + $0x90] sm:$0xff] %v794
      %827 = vst [vmem:[#allocation2 + $0x98] sm:$0xff] %v795
      %828 = vst [vmem:[#allocation2 + $0xa0] sm:$0xff] %v796
      %829 = vst [vmem:[#allocation2 + $0xa8] sm:$0xff] %v797
      %830 = vst [vmem:[#allocation2 + $0xb0] sm:$0xff] %v798
      %831 = vst [vmem:[#allocation2 + $0xb8] sm:$0xff] %v799
      %832 = vst [vmem:[#allocation2 + $0xc0] sm:$0xff] %v800
      %833 = vst [vmem:[#allocation2 + $0xc8] sm:$0xff] %v801
      %834 = vst [vmem:[#allocation2 + $0xd0] sm:$0xff] %v802
      %835 = vst [vmem:[#allocation2 + $0xd8] sm:$0xff] %v803
      %836 = vst [vmem:[#allocation2 + $0xe0] sm:$0xff] %v804
      %837 = vst [vmem:[#allocation2 + $0xe8] sm:$0xff] %v805
      %838 = vst [vmem:[#allocation2 + $0xf0] sm:$0xff] %v806
      %839 = vst [vmem:[#allocation2 + $0xf8] sm:$0xff] %v807
      // Predicated region
      $region33: #{_matmul_impl.1} parent=27 // pred_check
        %p840 = pneg %p227
      $region34: #{_matmul_impl.1} parent=27 // pred_check_branch
        %842 = sbr.rel (%p840) target = $region36
      $region35: #{_matmul_impl.1} parent=27 // pred_region
        %v843 = vld [vmem:[#allocation2] sm:$0xff]
        %v844 = vld [vmem:[#allocation2 + $0x8] sm:$0xff]
        %v845 = vld [vmem:[#allocation2 + $0x10] sm:$0xff]
        %v846 = vld [vmem:[#allocation2 + $0x18] sm:$0xff]
        %v847 = vld [vmem:[#allocation2 + $0x20] sm:$0xff]
        %v848 = vld [vmem:[#allocation2 + $0x28] sm:$0xff]
        %v849 = vld [vmem:[#allocation2 + $0x30] sm:$0xff]
        %v850 = vld [vmem:[#allocation2 + $0x38] sm:$0xff]
        %v851 = vld [vmem:[#allocation2 + $0x40] sm:$0xff]
        %v852 = vld [vmem:[#allocation2 + $0x48] sm:$0xff]
        %v853 = vld [vmem:[#allocation2 + $0x50] sm:$0xff]
        %v854 = vld [vmem:[#allocation2 + $0x58] sm:$0xff]
        %v855 = vld [vmem:[#allocation2 + $0x60] sm:$0xff]
        %v856 = vld [vmem:[#allocation2 + $0x68] sm:$0xff]
        %v857 = vld [vmem:[#allocation2 + $0x70] sm:$0xff]
        %v858 = vld [vmem:[#allocation2 + $0x78] sm:$0xff]
        %v859 = vld [vmem:[#allocation2 + $0x80] sm:$0xff]
        %v860 = vld [vmem:[#allocation2 + $0x88] sm:$0xff]
        %v861 = vld [vmem:[#allocation2 + $0x90] sm:$0xff]
        %v862 = vld [vmem:[#allocation2 + $0x98] sm:$0xff]
        %v863 = vld [vmem:[#allocation2 + $0xa0] sm:$0xff]
        %v864 = vld [vmem:[#allocation2 + $0xa8] sm:$0xff]
        %v865 = vld [vmem:[#allocation2 + $0xb0] sm:$0xff]
        %v866 = vld [vmem:[#allocation2 + $0xb8] sm:$0xff]
        %v867 = vld [vmem:[#allocation2 + $0xc0] sm:$0xff]
        %v868 = vld [vmem:[#allocation2 + $0xc8] sm:$0xff]
        %v869 = vld [vmem:[#allocation2 + $0xd0] sm:$0xff]
        %v870 = vld [vmem:[#allocation2 + $0xd8] sm:$0xff]
        %v871 = vld [vmem:[#allocation2 + $0xe0] sm:$0xff]
        %v872 = vld [vmem:[#allocation2 + $0xe8] sm:$0xff]
        %v873 = vld [vmem:[#allocation2 + $0xf0] sm:$0xff]
        %v874 = vld [vmem:[#allocation2 + $0xf8] sm:$0xff]
        %v875 = vpack.c.bf16 %v844, %v843
        %v876 = vpack.c.bf16 %v846, %v845
        %v877 = vpack.c.bf16 %v848, %v847
        %v878 = vpack.c.bf16 %v850, %v849
        %v879 = vpack.c.bf16 %v852, %v851
        %v880 = vpack.c.bf16 %v854, %v853
        %v881 = vpack.c.bf16 %v856, %v855
        %v882 = vpack.c.bf16 %v858, %v857
        %v883 = vpack.c.bf16 %v860, %v859
        %v884 = vpack.c.bf16 %v862, %v861
        %v885 = vpack.c.bf16 %v864, %v863
        %v886 = vpack.c.bf16 %v866, %v865
        %v887 = vpack.c.bf16 %v868, %v867
        %v888 = vpack.c.bf16 %v870, %v869
        %v889 = vpack.c.bf16 %v872, %v871
        %v890 = vpack.c.bf16 %v874, %v873
        %v907 = vunpack.c.l.b16 %v875
        %v908 = vunpack.c.h.b16 %v875
        %v909 = vunpack.c.l.b16 %v876
        %v910 = vunpack.c.h.b16 %v876
        %v911 = vunpack.c.l.b16 %v877
        %v912 = vunpack.c.h.b16 %v877
        %v913 = vunpack.c.l.b16 %v878
        %v914 = vunpack.c.h.b16 %v878
        %v915 = vunpack.c.l.b16 %v879
        %v916 = vunpack.c.h.b16 %v879
        %v917 = vunpack.c.l.b16 %v880
        %v918 = vunpack.c.h.b16 %v880
        %v919 = vunpack.c.l.b16 %v881
        %v920 = vunpack.c.h.b16 %v881
        %v921 = vunpack.c.l.b16 %v882
        %v922 = vunpack.c.h.b16 %v882
        %v923 = vunpack.c.l.b16 %v883
        %v924 = vunpack.c.h.b16 %v883
        %v925 = vunpack.c.l.b16 %v884
        %v926 = vunpack.c.h.b16 %v884
        %v927 = vunpack.c.l.b16 %v885
        %v928 = vunpack.c.h.b16 %v885
        %v929 = vunpack.c.l.b16 %v886
        %v930 = vunpack.c.h.b16 %v886
        %v931 = vunpack.c.l.b16 %v887
        %v932 = vunpack.c.h.b16 %v887
        %v933 = vunpack.c.l.b16 %v888
        %v934 = vunpack.c.h.b16 %v888
        %v935 = vunpack.c.l.b16 %v889
        %v936 = vunpack.c.h.b16 %v889
        %v937 = vunpack.c.l.b16 %v890
        %v938 = vunpack.c.h.b16 %v890
        %v939 = vpack.c.b16 %v907, %v907
        %v940 = vpack.c.b16 %v908, %v908
        %v941 = vpack.c.b16 %v909, %v909
        %v942 = vpack.c.b16 %v910, %v910
        %v943 = vpack.c.b16 %v911, %v911
        %v944 = vpack.c.b16 %v912, %v912
        %v945 = vpack.c.b16 %v913, %v913
        %v946 = vpack.c.b16 %v914, %v914
        %v947 = vpack.c.b16 %v915, %v915
        %v948 = vpack.c.b16 %v916, %v916
        %v949 = vpack.c.b16 %v917, %v917
        %v950 = vpack.c.b16 %v918, %v918
        %v951 = vpack.c.b16 %v919, %v919
        %v952 = vpack.c.b16 %v920, %v920
        %v953 = vpack.c.b16 %v921, %v921
        %v954 = vpack.c.b16 %v922, %v922
        %v955 = vpack.c.b16 %v923, %v923
        %v956 = vpack.c.b16 %v924, %v924
        %v957 = vpack.c.b16 %v925, %v925
        %v958 = vpack.c.b16 %v926, %v926
        %v959 = vpack.c.b16 %v927, %v927
        %v960 = vpack.c.b16 %v928, %v928
        %v961 = vpack.c.b16 %v929, %v929
        %v962 = vpack.c.b16 %v930, %v930
        %v963 = vpack.c.b16 %v931, %v931
        %v964 = vpack.c.b16 %v932, %v932
        %v965 = vpack.c.b16 %v933, %v933
        %v966 = vpack.c.b16 %v934, %v934
        %v967 = vpack.c.b16 %v935, %v935
        %v968 = vpack.c.b16 %v936, %v936
        %v969 = vpack.c.b16 %v937, %v937
        %v970 = vpack.c.b16 %v938, %v938
        %1003 = vst [vmem:[%s224] sm:$0xf] %v939
        %1004 = vst [vmem:[%s224 + $0x4] sm:$0xf] %v940
        %1005 = vst [vmem:[%s224 + $0x8] sm:$0xf] %v941
        %1006 = vst [vmem:[%s224 + $0xc] sm:$0xf] %v942
        %1007 = vst [vmem:[%s224 + $0x10] sm:$0xf] %v943
        %1008 = vst [vmem:[%s224 + $0x14] sm:$0xf] %v944
        %1009 = vst [vmem:[%s224 + $0x18] sm:$0xf] %v945
        %1010 = vst [vmem:[%s224 + $0x1c] sm:$0xf] %v946
        %1011 = vst [vmem:[%s224 + $0x20] sm:$0xf] %v947
        %1012 = vst [vmem:[%s224 + $0x24] sm:$0xf] %v948
        %1013 = vst [vmem:[%s224 + $0x28] sm:$0xf] %v949
        %1014 = vst [vmem:[%s224 + $0x2c] sm:$0xf] %v950
        %1015 = vst [vmem:[%s224 + $0x30] sm:$0xf] %v951
        %1016 = vst [vmem:[%s224 + $0x34] sm:$0xf] %v952
        %1017 = vst [vmem:[%s224 + $0x38] sm:$0xf] %v953
        %1018 = vst [vmem:[%s224 + $0x3c] sm:$0xf] %v954
        %1019 = vst [vmem:[%s224 + $0x40] sm:$0xf] %v955
        %1020 = vst [vmem:[%s224 + $0x44] sm:$0xf] %v956
        %1021 = vst [vmem:[%s224 + $0x48] sm:$0xf] %v957
        %1022 = vst [vmem:[%s224 + $0x4c] sm:$0xf] %v958
        %1023 = vst [vmem:[%s224 + $0x50] sm:$0xf] %v959
        %1024 = vst [vmem:[%s224 + $0x54] sm:$0xf] %v960
        %1025 = vst [vmem:[%s224 + $0x58] sm:$0xf] %v961
        %1026 = vst [vmem:[%s224 + $0x5c] sm:$0xf] %v962
        %1027 = vst [vmem:[%s224 + $0x60] sm:$0xf] %v963
        %1028 = vst [vmem:[%s224 + $0x64] sm:$0xf] %v964
        %1029 = vst [vmem:[%s224 + $0x68] sm:$0xf] %v965
        %1030 = vst [vmem:[%s224 + $0x6c] sm:$0xf] %v966
        %1031 = vst [vmem:[%s224 + $0x70] sm:$0xf] %v967
        %1032 = vst [vmem:[%s224 + $0x74] sm:$0xf] %v968
        %1033 = vst [vmem:[%s224 + $0x78] sm:$0xf] %v969
        %1034 = vst [vmem:[%s224 + $0x7c] sm:$0xf] %v970
      $region36: #{_matmul_impl.1} parent=27 // pred_fallthru
        _
      %s1035 = smul.u32 32, %s18
      %p1036 = scmp.lt.s32.totalorder %s1035, 127
      %s1037 = scalar_select %p1036, %s1035, 127
      %p1038 = scmp.lt.s32.totalorder %s19, 0
      %s1039 = scalar_select %p1038, %s19, 0
      %s1040 = sadd.s32 %s1039, %s1037
      %s1041 = smul.addr %s1040, 4
      %s1042 = scalar_lea.vmem %s2, %s1041
      // Predicated region
      $region37: #{_matmul_impl.1} parent=27 // pred_check
        %p1043 = pneg %p108
      $region38: #{_matmul_impl.1} parent=27 // pred_check_branch
        %1045 = sbr.rel (%p1043) target = $region40
      $region39: #{_matmul_impl.1} parent=27 // pred_region
        %s1046 = smul.u32 32, %s18
      $region40: #{_matmul_impl.1} parent=27 // pred_fallthru
        _
    $region28: #{_matmul_impl.1} parent=5 // pred_fallthru
      _
    %p1047 = scmp.le.s32.totalorder 2, %s8
    // Predicated region
    $region41: #{_matmul_impl.1} parent=5 // pred_check
      %p1048 = pneg %p1047
    $region42: #{_matmul_impl.1} parent=5 // pred_check_branch
      %1050 = sbr.rel (%p1048) target = $region44
    $region43: #{_matmul_impl.1} parent=5 // pred_region
      %s1051 = ssub.s32 %s8, 2
      // Predicated region
      $region45: #{_matmul_impl.1} parent=43 // pred_check
        %p1052 = pneg %p114
      $region46: #{_matmul_impl.1} parent=43 // pred_check_branch
        %1054 = sbr.rel (%p1052) target = $region48
      $region47: #{_matmul_impl.1} parent=43 // pred_region
        %s1055 = smul.u32 32, %s21
        %p1056 = scmp.lt.s32.totalorder %s1055, 127
        %s1057 = scalar_select %p1056, %s1055, 127
        %p1058 = scmp.lt.s32.totalorder %s22, 0
        %s1059 = scalar_select %p1058, %s22, 0
        %s1060 = sadd.s32 %s1059, %s1057
        %s1061 = smul.addr %s1060, 4
        %s1062 = scalar_lea.vmem %s2, %s1061
      $region48: #{_matmul_impl.1} parent=43 // pred_fallthru
        _
    $region44: #{_matmul_impl.1} parent=5 // pred_fallthru
      _
  $region6: #{_matmul_impl.1} parent=0 // loop_footer
    %s12 = sadd.s32 1, %s8
  $region7: #{_matmul_impl.1} parent=0 // loop_footer_branch
    %7 = sbr.rel target = $region3
  $region8: #{_matmul_impl.1} parent=0 // loop_exit
    _

</llo_original>
